<compile_context>
chip_gen: v5e
topology: v5e:2x2
jax: 0.10.0
libtpu: 0.0.40
codegen_flags: <defaults>
</compile_context>

<pallas_src>
import functools

import numpy as np
import jax
import jax.numpy as jnp
from jax import lax
from jax.experimental import pallas as pl
from jax.experimental.pallas import tpu as pltpu


def get_rotary_matrix(context_window, embedding_dim):
    # Faithful port of the reference (including the `i - 1` exponent quirk).
    # Used only by the pure-JAX reference check in __main__.
    R = np.zeros((context_window, embedding_dim, embedding_dim), dtype=np.float32)
    for position in range(context_window):
        for i in range(embedding_dim // 2):
            theta = 10000.0 ** (-2.0 * (i - 1) / embedding_dim)
            m_theta = position * theta
            R[position, 2 * i, 2 * i] = np.cos(m_theta)
            R[position, 2 * i, 2 * i + 1] = -np.sin(m_theta)
            R[position, 2 * i + 1, 2 * i] = np.sin(m_theta)
            R[position, 2 * i + 1, 2 * i + 1] = np.cos(m_theta)
    return jnp.asarray(R)


@functools.lru_cache(maxsize=None)
def _rope_tables(b, m, d, d_pad):
    """Elementwise RoPE coefficient tables equivalent to right-multiplying by R[p].

    q_rot[p, 2i]   =  q[p, 2i]*cos + q[p, 2i+1]*sin
    q_rot[p, 2i+1] = -q[p, 2i]*sin + q[p, 2i+1]*cos
    => q_rot = q*C + roll(q, -1)*A + roll(q, +1)*B  (per-lane coefficients).
    Cached per shape (host work done once); tiled over batch to match the
    flattened (b*m, d_pad) layout used by the kernel.
    """
    C = np.zeros((m, d_pad), dtype=np.float32)
    A = np.zeros((m, d_pad), dtype=np.float32)  # coefficient of right neighbor (even lanes)
    B = np.zeros((m, d_pad), dtype=np.float32)  # coefficient of left neighbor  (odd lanes)
    for p in range(m):
        for i in range(d // 2):
            theta = 10000.0 ** (-2.0 * (i - 1) / d)  # keep the reference's (i-1) quirk
            c = np.cos(p * theta)
            s = np.sin(p * theta)
            C[p, 2 * i] = c
            C[p, 2 * i + 1] = c
            A[p, 2 * i] = s
            B[p, 2 * i + 1] = -s
    # The in-kernel pltpu.roll wraps around: correctness relies on the wraparound
    # lanes and the padded region [d:] carrying zero coefficients.  Guard it.
    assert np.all(A[:, d_pad - 1] == 0.0) and np.all(B[:, 0] == 0.0)
    assert np.all(C[:, d:] == 0.0) and np.all(A[:, d:] == 0.0) and np.all(B[:, d:] == 0.0)
    tile = lambda t: np.tile(t, (b, 1))  # (b*m, d_pad)
    return tile(C), tile(A), tile(B)


@functools.lru_cache(maxsize=None)
def _block_causal_mask(b, m):
    """Additive mask for the flattened (b*m, b*m) scores: 0 where the key is in
    the same batch and not in the future, -1e30 elsewhere (cross-batch + upper
    triangle).  Cross-batch entries softmax to ~0, so the PV product is exact."""
    r = np.arange(b * m)
    same_batch = (r[:, None] // m) == (r[None, :] // m)
    causal = (r[None, :] % m) <= (r[:, None] % m)
    return np.where(same_batch & causal, 0.0, -1e30).astype(np.float32)


def _rope_attn_kernel(x_ref, w_ref, cos_ref, sin_r_ref, sin_l_ref, mask_ref, o_ref):
    # x_ref:    (b*m, d_pad)     bf16 (padded, pre-cast in the wrapper)
    # w_ref:    (3*d_pad, d_pad) bf16, nn.Linear (out, in) orientation; the q rows
    #                            are pre-scaled by 1/sqrt(d).
    # cos/sin:  (b*m, d_pad)     f32 RoPE coefficient tables
    # mask_ref: (b*m, b*m)       f32 additive causal + batch-block mask
    # o_ref:    (b*m, d_pad)     f32
    d_pad = x_ref.shape[1]

    # Fused QKV projection: one MXU matmul (x @ W_fused.T), f32 accumulation.
    dn_t = (((1,), (1,)), ((), ()))   # contract last dim of both (native y = x @ W.T)
    qkv = lax.dot_general(x_ref[...], w_ref[...], dn_t,
                          preferred_element_type=jnp.float32)       # (b*m, 3*d_pad)
    q = qkv[:, :d_pad]                 # lane-aligned 128-wide slices
    k = qkv[:, d_pad:2 * d_pad]
    v = qkv[:, 2 * d_pad:]

    cos = cos_ref[...]
    s_r = sin_r_ref[...]
    s_l = sin_l_ref[...]

    def rope(t):
        # Pair-neighbor terms via XLU lane rolls; coefficient tables are zero on
        # the wraparound lanes and the padded region (asserted at build time).
        right = pltpu.roll(t, d_pad - 1, 1)   # t[..., j+1]
        left = pltpu.roll(t, 1, 1)            # t[..., j-1]
        return t * cos + right * s_r + left * s_l

    # 1/sqrt(d) is already folded into w_q, so q_rot carries the softmax scale.
    q_rot = rope(q).astype(jnp.bfloat16)
    k_rot = rope(k).astype(jnp.bfloat16)
    vb = v.astype(jnp.bfloat16)

    # Block-diagonal scores over the flattened b*m axis: q_rot @ k_rot.T (f32 acc).
    scores = lax.dot_general(q_rot, k_rot, dn_t,
                             preferred_element_type=jnp.float32)    # (b*m, b*m)
    scores = scores + mask_ref[...]       # kills future and cross-batch entries

    smax = jnp.max(scores, axis=-1, keepdims=True)
    p = jnp.exp(scores - smax)
    attn = p * pl.reciprocal(jnp.sum(p, axis=-1, keepdims=True), approx=True)
    # TODO(synk): dropout_p=0.1 of F.scaled_dot_product_attention is omitted
    # (train-mode RNG in the reference; not reproducible deterministically).

    o_ref[...] = lax.dot_general(attn.astype(jnp.bfloat16), vb,
                                 (((1,), (0,)), ((), ())),
                                 preferred_element_type=jnp.float32)


def make_rope_masked_attention_head(w_q, w_k, w_v):
    """One-time weight prep (pad to lane-dense 128, fuse QKV, fold 1/sqrt(d) into
    w_q, cast to bf16) + a jitted forward.  Mirrors the nn.Module holding weights."""
    d = int(w_q.shape[0])
    d_pad = max(128, ((d + 127) // 128) * 128)   # lane-dense feature dim
    scale = 1.0 / np.sqrt(d)

    def pad_w(w, s=1.0):
        return jnp.pad(jnp.asarray(w, jnp.float32) * s,
                       ((0, d_pad - d), (0, d_pad - d)))

    # Fused (3*d_pad, d_pad) bf16 weight; q rows carry the 1/sqrt(d) softmax scale.
    w_fused = jnp.concatenate([pad_w(w_q, scale), pad_w(w_k), pad_w(w_v)],
                              axis=0).astype(jnp.bfloat16)

    @jax.jit
    def forward(x):
        b, m, d_in = x.shape
        assert d_in == d
        bm = b * m
        # Host-precomputed constants (lru-cached per shape; jit-time constants).
        C, A, B = _rope_tables(b, m, d, d_pad)
        mask = _block_causal_mask(b, m)

        x_p = jnp.pad(x, ((0, 0), (0, 0), (0, d_pad - d)))
        x_p = x_p.astype(jnp.bfloat16).reshape(bm, d_pad)

        out = pl.pallas_call(
            _rope_attn_kernel,
            out_shape=jax.ShapeDtypeStruct((bm, d_pad), jnp.float32),
            grid_spec=pltpu.PrefetchScalarGridSpec(
                num_scalar_prefetch=0,
                grid=(1,),   # whole problem fits VMEM easily at these sizes
                in_specs=[
                    pl.BlockSpec((bm, d_pad), lambda i: (0, 0)),
                    pl.BlockSpec((3 * d_pad, d_pad), lambda i: (0, 0)),
                    pl.BlockSpec((bm, d_pad), lambda i: (0, 0)),
                    pl.BlockSpec((bm, d_pad), lambda i: (0, 0)),
                    pl.BlockSpec((bm, d_pad), lambda i: (0, 0)),
                    pl.BlockSpec((bm, bm), lambda i: (0, 0)),
                ],
                out_specs=pl.BlockSpec((bm, d_pad), lambda i: (0, 0)),
            ),
            compiler_params=pltpu.CompilerParams(
                dimension_semantics=("arbitrary",)),
        )(x_p, w_fused, jnp.asarray(C), jnp.asarray(A), jnp.asarray(B),
          jnp.asarray(mask))
        # TODO(synk): for realistic context lengths, switch to flash-style q/kv
        # tiling with a "parallel" q-tile grid axis (uses both v7x TensorCores and
        # keeps the f32 scores block within v7x's 64 MiB VMEM); at b*m=16 a single
        # grid step is fastest (launch-overhead bound).
        return out.reshape(b, m, d_pad)[:, :, :d]

    return forward


def _reference(x, w_q, w_k, w_v, R):
    b, m, d = x.shape
    q = x @ w_q.T
    k = x @ w_k.T
    v = x @ w_v.T
    Rm = R[:m]
    q_rot = jnp.einsum('bmd,mde->bme', q, Rm)
    k_rot = jnp.einsum('bmd,mde->bme', k, Rm)
    scores = jnp.einsum('bqd,bkd->bqk', q_rot, k_rot) / jnp.sqrt(jnp.float32(d))
    mask = jnp.tril(jnp.ones((m, m), dtype=bool))
    scores = jnp.where(mask[None], scores, -1e30)
    attn = jax.nn.softmax(scores, axis=-1)
    return jnp.einsum('bqk,bkd->bqd', attn, v)


if __name__ == "__main__":
    config = {"d_model": 32, "context_window": 16}
    b, m, d = 2, 8, config["d_model"]

    key = jax.random.PRNGKey(0)
    kx, kq, kk, kv = jax.random.split(key, 4)
    x = jax.random.normal(kx, (b, m, d), dtype=jnp.float32)
    # Deterministic "nn.Linear(d, d, bias=False)" weights, shape (out, in) = (d, d).
    bound = 1.0 / np.sqrt(d)
    w_q = jax.random.uniform(kq, (d, d), jnp.float32, -bound, bound)
    w_k = jax.random.uniform(kk, (d, d), jnp.float32, -bound, bound)
    w_v = jax.random.uniform(kv, (d, d), jnp.float32, -bound, bound)

    head = make_rope_masked_attention_head(w_q, w_k, w_v)
    out = jax.block_until_ready(head(x))

    R = get_rotary_matrix(config["context_window"], config["d_model"])
    ref = _reference(x, w_q, w_k, w_v, R)
    # bf16 MXU operands + approx softmax reciprocal -> slightly looser tolerance.
    np.testing.assert_allclose(np.asarray(out), np.asarray(ref), rtol=3e-2, atol=3e-2)

    print("KERNEL_OK")
</pallas_src>

<mosaic_0001>
module attributes {stable_mosaic.version = 11 : i64} {
  func.func @_rope_attn_kernel(%arg0: i32, %arg1: memref<16x128xbf16, #tpu.memory_space<vmem>>, %arg2: memref<384x128xbf16, #tpu.memory_space<vmem>>, %arg3: memref<16x128xf32, #tpu.memory_space<vmem>>, %arg4: memref<16x128xf32, #tpu.memory_space<vmem>>, %arg5: memref<16x128xf32, #tpu.memory_space<vmem>>, %arg6: memref<16x16xf32, #tpu.memory_space<vmem>>, %arg7: memref<16x128xf32, #tpu.memory_space<vmem>>) attributes {dimension_semantics = [#tpu.dimension_semantics<arbitrary>], iteration_bounds = array<i64: 1>, scalar_prefetch = 0 : i64, scratch_operands = 0 : i64, tpu.core_type = #tpu.core_type<tc>, window_params = [{pipeline_mode = #tpu.pipeline_mode<synchronous>, transform_indices = @transform_0, window_bounds = array<i64: 16, 128>}, {pipeline_mode = #tpu.pipeline_mode<synchronous>, transform_indices = @transform_1, window_bounds = array<i64: 384, 128>}, {pipeline_mode = #tpu.pipeline_mode<synchronous>, transform_indices = @transform_2, window_bounds = array<i64: 16, 128>}, {pipeline_mode = #tpu.pipeline_mode<synchronous>, transform_indices = @transform_3, window_bounds = array<i64: 16, 128>}, {pipeline_mode = #tpu.pipeline_mode<synchronous>, transform_indices = @transform_4, window_bounds = array<i64: 16, 128>}, {pipeline_mode = #tpu.pipeline_mode<synchronous>, transform_indices = @transform_5, window_bounds = array<i64: 16, 16>}, {pipeline_mode = #tpu.pipeline_mode<synchronous>, transform_indices = @transform_6, window_bounds = array<i64: 16, 128>}]} {
    %c0 = arith.constant 0 : index
    %c0_0 = arith.constant 0 : index
    %0 = vector.load %arg1[%c0, %c0_0] : memref<16x128xbf16, #tpu.memory_space<vmem>>, vector<16x128xbf16>
    %c0_1 = arith.constant 0 : index
    %c0_2 = arith.constant 0 : index
    %1 = vector.load %arg2[%c0_1, %c0_2] : memref<384x128xbf16, #tpu.memory_space<vmem>>, vector<384x128xbf16>
    %cst = arith.constant dense<0.000000e+00> : vector<16x384xf32>
    %2 = tpu.matmul %0, %1, %cst {dimension_numbers = #tpu.dot_dimension_numbers<[1], [1], [0], [0], [0, 0, 1, 0], [], []>} : vector<16x128xbf16>, vector<384x128xbf16>, vector<16x384xf32> -> vector<16x384xf32>
    %3 = vector.extract_strided_slice %2 {offsets = [0, 0], sizes = [16, 128], strides = [1, 1]} : vector<16x384xf32> to vector<16x128xf32>
    %4 = vector.extract_strided_slice %2 {offsets = [0, 128], sizes = [16, 128], strides = [1, 1]} : vector<16x384xf32> to vector<16x128xf32>
    %5 = vector.extract_strided_slice %2 {offsets = [0, 256], sizes = [16, 128], strides = [1, 1]} : vector<16x384xf32> to vector<16x128xf32>
    %c0_3 = arith.constant 0 : index
    %c0_4 = arith.constant 0 : index
    %6 = vector.load %arg3[%c0_3, %c0_4] : memref<16x128xf32, #tpu.memory_space<vmem>>, vector<16x128xf32>
    %c0_5 = arith.constant 0 : index
    %c0_6 = arith.constant 0 : index
    %7 = vector.load %arg4[%c0_5, %c0_6] : memref<16x128xf32, #tpu.memory_space<vmem>>, vector<16x128xf32>
    %c0_7 = arith.constant 0 : index
    %c0_8 = arith.constant 0 : index
    %8 = vector.load %arg5[%c0_7, %c0_8] : memref<16x128xf32, #tpu.memory_space<vmem>>, vector<16x128xf32>
    %c127_i32 = arith.constant 127 : i32
    %9 = tpu.dynamic_rotate %3 by %c127_i32 dim 1 : vector<16x128xf32>, i32 -> vector<16x128xf32>
    %c1_i32 = arith.constant 1 : i32
    %10 = tpu.dynamic_rotate %3 by %c1_i32 dim 1 : vector<16x128xf32>, i32 -> vector<16x128xf32>
    %11 = arith.mulf %3, %6 : vector<16x128xf32>
    %12 = arith.mulf %9, %7 : vector<16x128xf32>
    %13 = arith.addf %11, %12 : vector<16x128xf32>
    %14 = arith.mulf %10, %8 : vector<16x128xf32>
    %15 = arith.addf %13, %14 : vector<16x128xf32>
    %16 = arith.truncf %15 : vector<16x128xf32> to vector<16x128xbf16>
    %c127_i32_9 = arith.constant 127 : i32
    %17 = tpu.dynamic_rotate %4 by %c127_i32_9 dim 1 : vector<16x128xf32>, i32 -> vector<16x128xf32>
    %c1_i32_10 = arith.constant 1 : i32
    %18 = tpu.dynamic_rotate %4 by %c1_i32_10 dim 1 : vector<16x128xf32>, i32 -> vector<16x128xf32>
    %19 = arith.mulf %4, %6 : vector<16x128xf32>
    %20 = arith.mulf %17, %7 : vector<16x128xf32>
    %21 = arith.addf %19, %20 : vector<16x128xf32>
    %22 = arith.mulf %18, %8 : vector<16x128xf32>
    %23 = arith.addf %21, %22 : vector<16x128xf32>
    %24 = arith.truncf %23 : vector<16x128xf32> to vector<16x128xbf16>
    %25 = arith.truncf %5 : vector<16x128xf32> to vector<16x128xbf16>
    %cst_11 = arith.constant dense<0.000000e+00> : vector<16x16xf32>
    %26 = tpu.matmul %16, %24, %cst_11 {dimension_numbers = #tpu.dot_dimension_numbers<[1], [1], [0], [0], [0, 0, 1, 0], [], []>} : vector<16x128xbf16>, vector<16x128xbf16>, vector<16x16xf32> -> vector<16x16xf32>
    %c0_12 = arith.constant 0 : index
    %c0_13 = arith.constant 0 : index
    %27 = vector.load %arg6[%c0_12, %c0_13] : memref<16x16xf32, #tpu.memory_space<vmem>>, vector<16x16xf32>
    %28 = arith.addf %26, %27 : vector<16x16xf32>
    %cst_14 = arith.constant dense<0xFF800000> : vector<16xf32>
    %29 = vector.multi_reduction <maximumf>, %28, %cst_14 [1] : vector<16x16xf32> to vector<16xf32>
    %30 = vector.shape_cast %29 : vector<16xf32> to vector<16x1xf32>
    %31 = vector.broadcast %30 : vector<16x1xf32> to vector<16x16xf32>
    %32 = arith.subf %28, %31 : vector<16x16xf32>
    %33 = math.exp %32 : vector<16x16xf32>
    %cst_15 = arith.constant dense<0.000000e+00> : vector<16xf32>
    %34 = vector.multi_reduction <add>, %33, %cst_15 [1] : vector<16x16xf32> to vector<16xf32>
    %35 = vector.shape_cast %34 : vector<16xf32> to vector<16x1xf32>
    %36 = tpu.reciprocal %35 {approx = true} : vector<16x1xf32> -> vector<16x1xf32>
    %37 = vector.broadcast %36 : vector<16x1xf32> to vector<16x16xf32>
    %38 = arith.mulf %33, %37 : vector<16x16xf32>
    %39 = arith.truncf %38 : vector<16x16xf32> to vector<16x16xbf16>
    %cst_16 = arith.constant dense<0.000000e+00> : vector<16x128xf32>
    %40 = tpu.matmul %39, %25, %cst_16 {dimension_numbers = #tpu.dot_dimension_numbers<[1], [0], [0], [1], [0, 0, 1, 1], [], []>} : vector<16x16xbf16>, vector<16x128xbf16>, vector<16x128xf32> -> vector<16x128xf32>
    %c0_17 = arith.constant 0 : index
    %c0_18 = arith.constant 0 : index
    %41 = vector.load %arg7[%c0_17, %c0_18] : memref<16x128xf32, #tpu.memory_space<vmem>>, vector<16x128xf32>
    tpu.vector_store %arg7[%c0_17, %c0_18], %40 {strides = array<i32>} : memref<16x128xf32, #tpu.memory_space<vmem>>, vector<16x128xf32>,
    return
  }
  func.func @transform_0(%arg0: i32) -> (i32, i32) {
    %c0_i32 = arith.constant 0 : i32
    %c0_i32_0 = arith.constant 0 : i32
    %c0_i32_1 = arith.constant 0 : i32
    return %c0_i32, %c0_i32_0 : i32, i32
  }
  func.func @transform_1(%arg0: i32) -> (i32, i32) {
    %c0_i32 = arith.constant 0 : i32
    %c0_i32_0 = arith.constant 0 : i32
    %c0_i32_1 = arith.constant 0 : i32
    return %c0_i32, %c0_i32_0 : i32, i32
  }
  func.func @transform_2(%arg0: i32) -> (i32, i32) {
    %c0_i32 = arith.constant 0 : i32
    %c0_i32_0 = arith.constant 0 : i32
    %c0_i32_1 = arith.constant 0 : i32
    return %c0_i32, %c0_i32_0 : i32, i32
  }
  func.func @transform_3(%arg0: i32) -> (i32, i32) {
    %c0_i32 = arith.constant 0 : i32
    %c0_i32_0 = arith.constant 0 : i32
    %c0_i32_1 = arith.constant 0 : i32
    return %c0_i32, %c0_i32_0 : i32, i32
  }
  func.func @transform_4(%arg0: i32) -> (i32, i32) {
    %c0_i32 = arith.constant 0 : i32
    %c0_i32_0 = arith.constant 0 : i32
    %c0_i32_1 = arith.constant 0 : i32
    return %c0_i32, %c0_i32_0 : i32, i32
  }
  func.func @transform_5(%arg0: i32) -> (i32, i32) {
    %c0_i32 = arith.constant 0 : i32
    %c0_i32_0 = arith.constant 0 : i32
    %c0_i32_1 = arith.constant 0 : i32
    return %c0_i32, %c0_i32_0 : i32, i32
  }
  func.func @transform_6(%arg0: i32) -> (i32, i32) {
    %c0_i32 = arith.constant 0 : i32
    %c0_i32_0 = arith.constant 0 : i32
    %c0_i32_1 = arith.constant 0 : i32
    return %c0_i32, %c0_i32_0 : i32, i32
  }
}

</mosaic_0001>

<llo_original>
// kernel: forward.1
$region0: #{forward.1}
  #allocation0 [shape = 'u32[]', space=smem, size = 0x4, offset = 0x4, fixed_abs, tag = 'smem constant byte address 0x4 - core index']
  #allocation1 [shape = 'u32[72,128]{1,0:T(1,128)}', space=vmem, size = 0x9000, scoped, tag = 'internal scratch']
  %s0 = inlined_call_operand.vmem [shape: bf16[16,128], index: 0, kind: input, shape index: {}]
  %s1 = inlined_call_operand.hbm [shape: bf16[384,128], index: 1, kind: input, shape index: {}]
  %s2 = inlined_call_operand.hbm [shape: f32[16,128], index: 2, kind: input, shape index: {}]
  %s3 = inlined_call_operand.hbm [shape: f32[16,128], index: 3, kind: input, shape index: {}]
  %s4 = inlined_call_operand.vmem [shape: f32[16,128], index: 4, kind: input, shape index: {}]
  %s5 = inlined_call_operand.vmem [shape: f32[16,16], index: 5, kind: input, shape index: {}]
  %s6 = inlined_call_operand.hbm [shape: f32[16,128], index: 6, kind: output, shape index: {}]
  %s7 = sld [smem:[#allocation0]]
  $region46: #{forward.1} parent=0
    _
  %s9 = ssub.s32 1, %s7
  %s10 = scalar_select 0, %s9, %s7
  $region1: #{forward.1} parent=0
    #allocation2 [shape = 'u8[98304]{0}', space=vmem, size = 0x18000, scoped, tag = 'input window, operand 1, single buffered']
    #allocation3 [shape = 's32[1]{0}', space=sflag, size = 0x4, scoped, tag = 'scoped memory for forward.1']
    #allocation4 [shape = 's32[1]{0}', space=sflag, size = 0x4, scoped, tag = 'scoped memory for forward.1']
    #allocation5 [shape = 'u8[8192]{0}', space=vmem, size = 0x2000, scoped, tag = 'input window, operand 2, single buffered']
    #allocation6 [shape = 's32[1]{0}', space=sflag, size = 0x4, scoped, tag = 'scoped memory for forward.1']
    #allocation7 [shape = 'u8[8192]{0}', space=vmem, size = 0x2000, scoped, tag = 'input window, operand 3, single buffered']
    #allocation8 [shape = 'u8[8192]{0}', space=vmem, size = 0x2000, scoped, tag = 'output window, operand 0, single buffered']
    %11 = vsyncpa [#allocation3], 0
    %12 = vsyncpa [#allocation6], 0
    %13 = vsyncpa [#allocation4], 0
    // Predicated region
    $region2: #{forward.1} parent=1 // pred_check
      _
    $region3: #{forward.1} parent=1 // pred_check_branch
      %15 = sbr.rel (0) target = $region5
    $region4: #{forward.1} parent=1 // pred_region
      _
    $region5: #{forward.1} parent=1 // pred_fallthru
      _
    // Predicated region
    $region6: #{forward.1} parent=1 // pred_check
      _
    $region7: #{forward.1} parent=1 // pred_check_branch
      %17 = sbr.rel (0) target = $region9
    $region8: #{forward.1} parent=1 // pred_region
      %19 = vsyncadd [#allocation3], 0
      %s20 = sshll.u32 %s1, 4
      %s21 = int_to_ptr.hbm [resolvable:$true] %s20
      %s22 = sshll.u32 [#allocation2], 4
      %s23 = int_to_ptr.vmem [resolvable:$true] %s22
      %28 = dma.hbm_to_vmem [thread:$0]  %s21, 3072, %s23, [#allocation3], 64, 64, 4
    $region9: #{forward.1} parent=1 // pred_fallthru
      _
    // Predicated region
    $region10: #{forward.1} parent=1 // pred_check
      _
    $region11: #{forward.1} parent=1 // pred_check_branch
      %30 = sbr.rel (0) target = $region13
    $region12: #{forward.1} parent=1 // pred_region
      %32 = vsyncadd [#allocation6], 0
      %s33 = sshll.u32 %s2, 4
      %s34 = int_to_ptr.hbm [resolvable:$true] %s33
      %s35 = sshll.u32 [#allocation5], 4
      %s36 = int_to_ptr.vmem [resolvable:$true] %s35
      %41 = dma.hbm_to_vmem [thread:$0]  %s34, 256, %s36, [#allocation6], 128, 128, 8
    $region13: #{forward.1} parent=1 // pred_fallthru
      _
    // Predicated region
    $region14: #{forward.1} parent=1 // pred_check
      _
    $region15: #{forward.1} parent=1 // pred_check_branch
      %43 = sbr.rel (0) target = $region17
    $region16: #{forward.1} parent=1 // pred_region
      %45 = vsyncadd [#allocation6], 0
      %s46 = sshll.u32 %s3, 4
      %s47 = int_to_ptr.hbm [resolvable:$true] %s46
      %s48 = sshll.u32 [#allocation7], 4
      %s49 = int_to_ptr.vmem [resolvable:$true] %s48
      %54 = dma.hbm_to_vmem [thread:$0]  %s47, 256, %s49, [#allocation6], 128, 128, 8
    $region17: #{forward.1} parent=1 // pred_fallthru
      _
    // Predicated region
    $region18: #{forward.1} parent=1 // pred_check
      _
    $region19: #{forward.1} parent=1 // pred_check_branch
      %56 = sbr.rel (0) target = $region21
    $region20: #{forward.1} parent=1 // pred_region
      _
    $region21: #{forward.1} parent=1 // pred_fallthru
      _
    // Predicated region
    $region22: #{forward.1} parent=1 // pred_check
      _
    $region23: #{forward.1} parent=1 // pred_check_branch
      %58 = sbr.rel (0) target = $region25
    $region24: #{forward.1} parent=1 // pred_region
      _
    $region25: #{forward.1} parent=1 // pred_fallthru
      _
    // Predicated region
    $region26: #{forward.1} parent=1 // pred_check
      _
    $region27: #{forward.1} parent=1 // pred_check_branch
      %60 = sbr.rel (0) target = $region29
    $region28: #{forward.1} parent=1 // pred_region
      %62 = dma.done [#allocation3], 3072
    $region29: #{forward.1} parent=1 // pred_fallthru
      _
    // Predicated region
    $region30: #{forward.1} parent=1 // pred_check
      _
    $region31: #{forward.1} parent=1 // pred_check_branch
      %64 = sbr.rel (0) target = $region33
    $region32: #{forward.1} parent=1 // pred_region
      %66 = dma.done [#allocation6], 256
    $region33: #{forward.1} parent=1 // pred_fallthru
      _
    // Predicated region
    $region34: #{forward.1} parent=1 // pred_check
      _
    $region35: #{forward.1} parent=1 // pred_check_branch
      %68 = sbr.rel (0) target = $region37
    $region36: #{forward.1} parent=1 // pred_region
      %70 = dma.done [#allocation6], 256
    $region37: #{forward.1} parent=1 // pred_fallthru
      _
    %v72 = vld [vmem:[%s0] sm:$0xf]
    %v73 = vld [vmem:[%s0 + $0x4] sm:$0xf]
    %v74 = vld [vmem:[#allocation2] sm:$0xf]
    %v75 = vld [vmem:[#allocation2 + $0x4] sm:$0xf]
    %v76 = vld [vmem:[#allocation2 + $0x8] sm:$0xf]
    %v77 = vld [vmem:[#allocation2 + $0xc] sm:$0xf]
    %v78 = vld [vmem:[#allocation2 + $0x10] sm:$0xf]
    %v79 = vld [vmem:[#allocation2 + $0x14] sm:$0xf]
    %v80 = vld [vmem:[#allocation2 + $0x18] sm:$0xf]
    %v81 = vld [vmem:[#allocation2 + $0x1c] sm:$0xf]
    %v82 = vld [vmem:[#allocation2 + $0x20] sm:$0xf]
    %v83 = vld [vmem:[#allocation2 + $0x24] sm:$0xf]
    %v84 = vld [vmem:[#allocation2 + $0x28] sm:$0xf]
    %v85 = vld [vmem:[#allocation2 + $0x2c] sm:$0xf]
    %v86 = vld [vmem:[#allocation2 + $0x30] sm:$0xf]
    %v87 = vld [vmem:[#allocation2 + $0x34] sm:$0xf]
    %v88 = vld [vmem:[#allocation2 + $0x38] sm:$0xf]
    %v89 = vld [vmem:[#allocation2 + $0x3c] sm:$0xf]
    %v90 = vld [vmem:[#allocation2 + $0x40] sm:$0xf]
    %v91 = vld [vmem:[#allocation2 + $0x44] sm:$0xf]
    %v92 = vld [vmem:[#allocation2 + $0x48] sm:$0xf]
    %v93 = vld [vmem:[#allocation2 + $0x4c] sm:$0xf]
    %v94 = vld [vmem:[#allocation2 + $0x50] sm:$0xf]
    %v95 = vld [vmem:[#allocation2 + $0x54] sm:$0xf]
    %v96 = vld [vmem:[#allocation2 + $0x58] sm:$0xf]
    %v97 = vld [vmem:[#allocation2 + $0x5c] sm:$0xf]
    %v98 = vld [vmem:[#allocation2 + $0x60] sm:$0xf]
    %v99 = vld [vmem:[#allocation2 + $0x64] sm:$0xf]
    %v100 = vld [vmem:[#allocation2 + $0x68] sm:$0xf]
    %v101 = vld [vmem:[#allocation2 + $0x6c] sm:$0xf]
    %v102 = vld [vmem:[#allocation2 + $0x70] sm:$0xf]
    %v103 = vld [vmem:[#allocation2 + $0x74] sm:$0xf]
    %v104 = vld [vmem:[#allocation2 + $0x78] sm:$0xf]
    %v105 = vld [vmem:[#allocation2 + $0x7c] sm:$0xf]
    %v106 = vld [vmem:[#allocation2 + $0x80] sm:$0xf]
    %v107 = vld [vmem:[#allocation2 + $0x84] sm:$0xf]
    %v108 = vld [vmem:[#allocation2 + $0x88] sm:$0xf]
    %v109 = vld [vmem:[#allocation2 + $0x8c] sm:$0xf]
    %v110 = vld [vmem:[#allocation2 + $0x90] sm:$0xf]
    %v111 = vld [vmem:[#allocation2 + $0x94] sm:$0xf]
    %v112 = vld [vmem:[#allocation2 + $0x98] sm:$0xf]
    %v113 = vld [vmem:[#allocation2 + $0x9c] sm:$0xf]
    %v114 = vld [vmem:[#allocation2 + $0xa0] sm:$0xf]
    %v115 = vld [vmem:[#allocation2 + $0xa4] sm:$0xf]
    %v116 = vld [vmem:[#allocation2 + $0xa8] sm:$0xf]
    %v117 = vld [vmem:[#allocation2 + $0xac] sm:$0xf]
    %v118 = vld [vmem:[#allocation2 + $0xb0] sm:$0xf]
    %v119 = vld [vmem:[#allocation2 + $0xb4] sm:$0xf]
    %v120 = vld [vmem:[#allocation2 + $0xb8] sm:$0xf]
    %v121 = vld [vmem:[#allocation2 + $0xbc] sm:$0xf]
    %v124 = vunpack.c.l.b16 %v72
    %v125 = vunpack.c.l.b16 %v73
    %v126 = vpack.c.b16 %v125, %v124
    %v176 = vunpack.c.l.b16 %v74
    %v177 = vunpack.c.l.b16 %v75
    %v178 = vunpack.c.l.b16 %v76
    %v179 = vunpack.c.l.b16 %v77
    %v180 = vunpack.c.l.b16 %v78
    %v181 = vunpack.c.l.b16 %v79
    %v182 = vunpack.c.l.b16 %v80
    %v183 = vunpack.c.l.b16 %v81
    %v184 = vunpack.c.l.b16 %v82
    %v185 = vunpack.c.l.b16 %v83
    %v186 = vunpack.c.l.b16 %v84
    %v187 = vunpack.c.l.b16 %v85
    %v188 = vunpack.c.l.b16 %v86
    %v189 = vunpack.c.l.b16 %v87
    %v190 = vunpack.c.l.b16 %v88
    %v191 = vunpack.c.l.b16 %v89
    %v192 = vunpack.c.l.b16 %v90
    %v193 = vunpack.c.l.b16 %v91
    %v194 = vunpack.c.l.b16 %v92
    %v195 = vunpack.c.l.b16 %v93
    %v196 = vunpack.c.l.b16 %v94
    %v197 = vunpack.c.l.b16 %v95
    %v198 = vunpack.c.l.b16 %v96
    %v199 = vunpack.c.l.b16 %v97
    %v200 = vunpack.c.l.b16 %v98
    %v201 = vunpack.c.l.b16 %v99
    %v202 = vunpack.c.l.b16 %v100
    %v203 = vunpack.c.l.b16 %v101
    %v204 = vunpack.c.l.b16 %v102
    %v205 = vunpack.c.l.b16 %v103
    %v206 = vunpack.c.l.b16 %v104
    %v207 = vunpack.c.l.b16 %v105
    %v208 = vunpack.c.l.b16 %v106
    %v209 = vunpack.c.l.b16 %v107
    %v210 = vunpack.c.l.b16 %v108
    %v211 = vunpack.c.l.b16 %v109
    %v212 = vunpack.c.l.b16 %v110
    %v213 = vunpack.c.l.b16 %v111
    %v214 = vunpack.c.l.b16 %v112
    %v215 = vunpack.c.l.b16 %v113
    %v216 = vunpack.c.l.b16 %v114
    %v217 = vunpack.c.l.b16 %v115
    %v218 = vunpack.c.l.b16 %v116
    %v219 = vunpack.c.l.b16 %v117
    %v220 = vunpack.c.l.b16 %v118
    %v221 = vunpack.c.l.b16 %v119
    %v222 = vunpack.c.l.b16 %v120
    %v223 = vunpack.c.l.b16 %v121
    %v224 = vpack.c.b16 %v177, %v176
    %v225 = vpack.c.b16 %v179, %v178
    %v226 = vpack.c.b16 %v181, %v180
    %v227 = vpack.c.b16 %v183, %v182
    %v228 = vpack.c.b16 %v185, %v184
    %v229 = vpack.c.b16 %v187, %v186
    %v230 = vpack.c.b16 %v189, %v188
    %v231 = vpack.c.b16 %v191, %v190
    %v232 = vpack.c.b16 %v193, %v192
    %v233 = vpack.c.b16 %v195, %v194
    %v234 = vpack.c.b16 %v197, %v196
    %v235 = vpack.c.b16 %v199, %v198
    %v236 = vpack.c.b16 %v201, %v200
    %v237 = vpack.c.b16 %v203, %v202
    %v238 = vpack.c.b16 %v205, %v204
    %v239 = vpack.c.b16 %v207, %v206
    %v240 = vpack.c.b16 %v209, %v208
    %v241 = vpack.c.b16 %v211, %v210
    %v242 = vpack.c.b16 %v213, %v212
    %v243 = vpack.c.b16 %v215, %v214
    %v244 = vpack.c.b16 %v217, %v216
    %v245 = vpack.c.b16 %v219, %v218
    %v246 = vpack.c.b16 %v221, %v220
    %v247 = vpack.c.b16 %v223, %v222
    %272 = vmatpush.bf16.xpose.msra.mxu0 %v231
    %273 = vmatpush.bf16.xpose.msra.mxu0 %v230
    %274 = vmatpush.bf16.xpose.msra.mxu0 %v229
    %275 = vmatpush.bf16.xpose.msra.mxu0 %v228
    %276 = vmatpush.bf16.xpose.msra.mxu0 %v227
    %277 = vmatpush.bf16.xpose.msra.mxu0 %v226
    %278 = vmatpush.bf16.xpose.msra.mxu0 %v225
    %279 = vmatpush.bf16.xpose.msra.mxu0 %v224
    %280 = vmatmul.bf16.gmra.mxu0 %v126
    %v281 = vpop.f32.mrf.mxu0
    %v282 = vadd.f32 0.0, %v281
    %v283 = vpop.f32.mrf.mxu0
    %v284 = vadd.f32 0.0, %v283
    %285 = vdwg.mxu0
    %286 = vmatpush.bf16.xpose.msra.mxu0 %v239
    %287 = vmatpush.bf16.xpose.msra.mxu0 %v238
    %288 = vmatpush.bf16.xpose.msra.mxu0 %v237
    %289 = vmatpush.bf16.xpose.msra.mxu0 %v236
    %290 = vmatpush.bf16.xpose.msra.mxu0 %v235
    %291 = vmatpush.bf16.xpose.msra.mxu0 %v234
    %292 = vmatpush.bf16.xpose.msra.mxu0 %v233
    %293 = vmatpush.bf16.xpose.msra.mxu0 %v232
    %294 = vmatmul.bf16.gmra.mxu0 %v126
    %v295 = vpop.f32.mrf.mxu0
    %v296 = vadd.f32 0.0, %v295
    %v297 = vpop.f32.mrf.mxu0
    %v298 = vadd.f32 0.0, %v297
    %299 = vdwg.mxu0
    %300 = vmatpush.bf16.xpose.msra.mxu0 %v247
    %301 = vmatpush.bf16.xpose.msra.mxu0 %v246
    %302 = vmatpush.bf16.xpose.msra.mxu0 %v245
    %303 = vmatpush.bf16.xpose.msra.mxu0 %v244
    %304 = vmatpush.bf16.xpose.msra.mxu0 %v243
    %305 = vmatpush.bf16.xpose.msra.mxu0 %v242
    %306 = vmatpush.bf16.xpose.msra.mxu0 %v241
    %307 = vmatpush.bf16.xpose.msra.mxu0 %v240
    %308 = vmatmul.bf16.gmra.mxu0 %v126
    %v309 = vpop.f32.mrf.mxu0
    %v310 = vadd.f32 0.0, %v309
    %v311 = vpop.f32.mrf.mxu0
    %v312 = vadd.f32 0.0, %v311
    %313 = vdwg.mxu0
    %v314 = vld [vmem:[#allocation5] sm:$0xff]
    %v315 = vld [vmem:[#allocation5 + $0x8] sm:$0xff]
    %v316 = vld [vmem:[#allocation7] sm:$0xff]
    %v317 = vld [vmem:[#allocation7 + $0x8] sm:$0xff]
    %v318 = vld [vmem:[%s4] sm:$0xff]
    %v319 = vld [vmem:[%s4 + $0x8] sm:$0xff]
    %320 = vrot.lane.b32.xlu0 %v282, 127
    %v321 = vpop.permute.xlu0 %320
    %322 = vrot.lane.b32.xlu0 %v284, 127
    %v323 = vpop.permute.xlu0 %322
    %324 = vrot.lane.b32.xlu0 %v282, 1
    %v325 = vpop.permute.xlu0 %324
    %326 = vrot.lane.b32.xlu0 %v284, 1
    %v327 = vpop.permute.xlu0 %326
    %v328 = vmul.f32 %v282, %v314
    %v329 = vmul.f32 %v284, %v315
    %v330 = vmul.f32 %v321, %v316
    %v331 = vmul.f32 %v323, %v317
    %v332 = vadd.f32 %v328, %v330
    %v333 = vadd.f32 %v329, %v331
    %v334 = vmul.f32 %v325, %v318
    %v335 = vmul.f32 %v327, %v319
    %v336 = vadd.f32 %v332, %v334
    %v337 = vadd.f32 %v333, %v335
    %v338 = vpack.c.bf16 %v337, %v336
    %339 = vrot.lane.b32.xlu0 %v296, 127
    %v340 = vpop.permute.xlu0 %339
    %341 = vrot.lane.b32.xlu0 %v298, 127
    %v342 = vpop.permute.xlu0 %341
    %343 = vrot.lane.b32.xlu0 %v296, 1
    %v344 = vpop.permute.xlu0 %343
    %345 = vrot.lane.b32.xlu0 %v298, 1
    %v346 = vpop.permute.xlu0 %345
    %v347 = vmul.f32 %v296, %v314
    %v348 = vmul.f32 %v298, %v315
    %v349 = vmul.f32 %v340, %v316
    %v350 = vmul.f32 %v342, %v317
    %v351 = vadd.f32 %v347, %v349
    %v352 = vadd.f32 %v348, %v350
    %v353 = vmul.f32 %v344, %v318
    %v354 = vmul.f32 %v346, %v319
    %v355 = vadd.f32 %v351, %v353
    %v356 = vadd.f32 %v352, %v354
    %v357 = vpack.c.bf16 %v356, %v355
    %v358 = vpack.c.bf16 %v312, %v310
    %v359 = vld [vmem:[%s5] sm:$0xff]
    %v360 = vld [vmem:[%s5 + $0x8] sm:$0xff]
    %361 = vmatpush.bf16.xpose.msra.mxu0 0
    %362 = vmatpush.bf16.xpose.msra.mxu0 0
    %363 = vmatpush.bf16.xpose.msra.mxu0 0
    %364 = vmatpush.bf16.xpose.msra.mxu0 0
    %365 = vmatpush.bf16.xpose.msra.mxu0 0
    %366 = vmatpush.bf16.xpose.msra.mxu0 0
    %367 = vmatpush.bf16.xpose.msra.mxu0 0
    %368 = vmatpush.bf16.xpose.msra.mxu0 %v357
    %369 = vmatmul.bf16.gmra.mxu0 %v338
    %v370 = vpop.f32.mrf.mxu0
    %v371 = vadd.f32 %v359, %v370
    %v372 = vpop.f32.mrf.mxu0
    %v373 = vadd.f32 %v360, %v372
    %374 = vdwg.mxu0
    %vm375 = vcmask 130048
    %v376 = vsel %vm375, %v371, -inf
    %377 = vmax.xlane.f32.xlu0 %v376
    %v378 = vpop.xlane.xlu0 %377
    %v379 = vsel %vm375, %v373, -inf
    %380 = vmax.xlane.f32.xlu0 %v379
    %v381 = vpop.xlane.xlu0 %380
    %v382 = vsub.f32 %v371, %v378
    %v383 = vsub.f32 %v373, %v381
    %v384 = vmul.f32 %v382, 1.442695
    %v385 = vpow.pop %v384
    %v386 = vmul.f32 %v383, 1.442695
    %v387 = vpow.pop %v386
    %v388 = vsel %vm375, %v385, 0.0
    %389 = vadd.xlane.f32.xlu0 %v388
    %v390 = vpop.xlane.xlu0 %389
    %v391 = vsel %vm375, %v387, 0.0
    %392 = vadd.xlane.f32.xlu0 %v391
    %v393 = vpop.xlane.xlu0 %392
    %v394 = vrcp.pop %v390
    %v395 = vrcp.pop %v393
    %v396 = vmul.f32 %v385, %v394
    %v397 = vmul.f32 %v387, %v395
    %v398 = vpack.c.bf16 %v397, %v396
    %v400 = vsel %vm375, %v398, 0
    %402 = vmatpush.bf16.msra.mxu0 0
    %403 = vmatpush.bf16.msra.mxu0 0
    %404 = vmatpush.bf16.msra.mxu0 0
    %405 = vmatpush.bf16.msra.mxu0 0
    %406 = vmatpush.bf16.msra.mxu0 0
    %407 = vmatpush.bf16.msra.mxu0 0
    %408 = vmatpush.bf16.msra.mxu0 0
    %409 = vmatpush.bf16.msra.mxu0 %v358
    %410 = vmatmul.bf16.gmra.mxu0 %v400
    %v411 = vpop.f32.mrf.mxu0
    %v412 = vadd.f32 0.0, %v411
    %v413 = vpop.f32.mrf.mxu0
    %v414 = vadd.f32 0.0, %v413
    %415 = vdwg.mxu0
    %416 = vst [vmem:[#allocation8] sm:$0xff] %v412
    %417 = vst [vmem:[#allocation8 + $0x8] sm:$0xff] %v414
    // Predicated region
    $region38: #{forward.1} parent=1 // pred_check
      _
    $region39: #{forward.1} parent=1 // pred_check_branch
      %419 = sbr.rel (0) target = $region41
    $region40: #{forward.1} parent=1 // pred_region
      %421 = vsyncadd [#allocation4], 0
      %s422 = sshll.u32 [#allocation8], 4
      %s423 = int_to_ptr.vmem [resolvable:$true] %s422
      %s424 = sshll.u32 %s6, 4
      %s425 = int_to_ptr.hbm [resolvable:$true] %s424
      %430 = dma.vmem_to_hbm [thread:$0]  %s423, 256, %s425, [#allocation4], 128, 128, 8
    $region41: #{forward.1} parent=1 // pred_fallthru
      _
    // Predicated region
    $region42: #{forward.1} parent=1 // pred_check
      _
    $region43: #{forward.1} parent=1 // pred_check_branch
      %432 = sbr.rel (0) target = $region45
    $region44: #{forward.1} parent=1 // pred_region
      %434 = dma.done [#allocation4], 256
    $region45: #{forward.1} parent=1 // pred_fallthru
      _
    %435 = vsyncpa [#allocation3], 1
    %436 = vsyncpa [#allocation6], 1
    %437 = vsyncpa [#allocation4], 1

</llo_original>
